<compile_context>
chip_gen: v7x
topology: tpu7x:2x2x1
jax: 0.10.0
libtpu: 0.0.40
codegen_flags: <defaults>
</compile_context>

<pallas_src>
import functools

import jax
import jax.numpy as jnp
from jax.experimental import pallas as pl
from jax.experimental.pallas import tpu as pltpu


LANE = 128
N_TILE_PREF = 512          # preferred row / K tile for the tiled fallback path


def _round_up(x, m):
    return ((x + m - 1) // m) * m


def _pick_tile(dim, preferred):
    """Largest tile <= preferred that divides dim (dim is a multiple of 128)."""
    t = min(preferred, dim)
    while dim % t != 0:
        t -= LANE
    return t


@functools.lru_cache(maxsize=None)
def _vmem_capacity_bytes():
    """Per-core VMEM capacity (64 MiB on v7x, 128 MiB on v5e/v6e)."""
    try:
        return int(pltpu.get_tpu_info().vmem_capacity_bytes)
    except Exception:
        return 64 * 1024 * 1024  # conservative fallback (v7x size)


def _vmem_cap():
    # Leave headroom for compiler-internal scratch + Pallas double buffers
    # (important on v7x where 64 MiB is the whole per-core VMEM).
    return (3 * _vmem_capacity_bytes()) // 4


def _vmem_limit(*tile_bytes):
    need = 4 * sum(tile_bytes)  # double-buffered in/out blocks + headroom
    return int(min(_vmem_cap(), max(32 * 1024 * 1024, need)))


def _pad_to(m, shape):
    pads = [(0, t - s) for s, t in zip(m.shape, shape)]
    return jnp.pad(m, pads)


# ===========================================================================
# Fused path: whole 3-layer forward in a single pallas_call (VMEM-resident).
# ===========================================================================

def gcn_fused_kernel(a_ref, x_ref, w1_ref, b1_ref, w2_ref, b2_ref,
                     w3_ref, b3_ref, o_ref):
    a = a_ref[...]                                   # [N, N] bf16, read once
    f32, bf16 = jnp.float32, jnp.bfloat16

    # ---- layer 1: relu(A_hat @ (X @ W1) + b1) ----
    h = jnp.dot(x_ref[...], w1_ref[...], preferred_element_type=f32)
    h = jnp.dot(a, h.astype(bf16), preferred_element_type=f32) + b1_ref[...]
    h = jnp.maximum(h, 0.0)

    # ---- layer 2: relu(A_hat @ (H @ W2) + b2) ----
    h = jnp.dot(h.astype(bf16), w2_ref[...], preferred_element_type=f32)
    h = jnp.dot(a, h.astype(bf16), preferred_element_type=f32) + b2_ref[...]
    h = jnp.maximum(h, 0.0)

    # ---- layer 3: A_hat @ (H @ W3) + b3 (no activation) ----
    h = jnp.dot(h.astype(bf16), w3_ref[...], preferred_element_type=f32)
    out = jnp.dot(a, h.astype(bf16), preferred_element_type=f32) + b3_ref[...]
    o_ref[...] = out.astype(o_ref.dtype)


def _fused_vmem_estimate(n, f_in, f_h, f_out):
    bf, f4 = 2, 4
    operands = (n * n * bf + n * f_in * bf
                + f_in * f_h * bf + f_h * f_h * bf + f_h * f_out * bf
                + (2 * f_h + f_out) * f4
                + n * f_out * f4)
    live_temps = 3 * n * f_h * f4   # generous bound on in-flight intermediates
    return operands + live_temps


@jax.jit
def gcn_forward_fused(params, x_pad, a_hat_pad):
    n = a_hat_pad.shape[0]
    f_out = params["w3"].shape[1]
    est = _fused_vmem_estimate(n, x_pad.shape[1], params["w1"].shape[1], f_out)
    limit = int(min(_vmem_cap(), max(2 * est, 16 * 1024 * 1024)))
    vmem_spec = pl.BlockSpec(memory_space=pltpu.MemorySpace.VMEM)
    return pl.pallas_call(
        gcn_fused_kernel,
        out_shape=jax.ShapeDtypeStruct((n, f_out), jnp.float32),
        in_specs=[vmem_spec] * 8,
        out_specs=vmem_spec,
        compiler_params=pltpu.CompilerParams(vmem_limit_bytes=limit),
    )(a_hat_pad, x_pad,
      params["w1"], params["b1"],
      params["w2"], params["b2"],
      params["w3"], params["b3"])


# ===========================================================================
# Tiled fallback path (graphs too large for full VMEM residency).
# ===========================================================================

# ------------------------- Stage 1: H = X @ W ------------------------------

def feature_transform_kernel(x_ref, w_ref, o_ref):
    o_ref[...] = jnp.dot(
        x_ref[...], w_ref[...], preferred_element_type=jnp.float32
    ).astype(o_ref.dtype)


def feature_transform(x, w, *, tm_pref=1024):
    """H = X @ W, row-tiled. x: [N, Fin] bf16, w: [Fin, Fout] bf16 (W resident)."""
    n, f_in = x.shape
    f_out = w.shape[1]
    tm = _pick_tile(n, tm_pref)
    return pl.pallas_call(
        feature_transform_kernel,
        out_shape=jax.ShapeDtypeStruct((n, f_out), jnp.bfloat16),
        grid=(n // tm,),
        in_specs=[
            pl.BlockSpec((tm, f_in), lambda i: (i, 0)),
            pl.BlockSpec((f_in, f_out), lambda i: (0, 0)),
        ],
        out_specs=pl.BlockSpec((tm, f_out), lambda i: (i, 0)),
        compiler_params=pltpu.CompilerParams(
            dimension_semantics=("parallel",),
            vmem_limit_bytes=_vmem_limit(
                tm * f_in * 2, f_in * f_out * 2, tm * f_out * 2
            ),
        ),
    )(x, w)


# ------------------ Stage 2: out = A_hat @ H + b (tiled) -------------------

def aggregate_kernel(a_ref, h_ref, b_ref, o_ref, acc_ref, *, apply_relu):
    k = pl.program_id(1)

    @pl.when(k == 0)
    def _():
        # Bias folded into the accumulator init (no epilogue add; bias block
        # has a constant index_map so it is fetched once).
        acc_ref[...] = jnp.zeros_like(acc_ref) + b_ref[...]

    acc_ref[...] += jnp.dot(
        a_ref[...], h_ref[...], preferred_element_type=jnp.float32
    )

    @pl.when(k == pl.num_programs(1) - 1)
    def _():
        out = acc_ref[...]
        if apply_relu:
            out = jnp.maximum(out, 0.0)
        o_ref[...] = out.astype(o_ref.dtype)


def aggregate(a_hat, h, b, *, apply_relu, out_dtype,
              tm_pref=N_TILE_PREF, tk_pref=N_TILE_PREF):
    """out = A_hat @ H + b (+ ReLU).

    The output tile spans the full feature dim, so A_hat ([N,N] bf16, the
    dominant HBM stream) is streamed exactly once per layer.
    """
    # TODO(synk): re-introduce a feature grid axis (masked tails) if F_pad
    #             ever exceeds ~1024 and VMEM pressure becomes the limit.
    n = a_hat.shape[0]
    f = h.shape[1]
    tm = _pick_tile(n, tm_pref)
    tk = _pick_tile(n, tk_pref)
    kernel = functools.partial(aggregate_kernel, apply_relu=apply_relu)
    out_bytes = jnp.dtype(out_dtype).itemsize
    return pl.pallas_call(
        kernel,
        out_shape=jax.ShapeDtypeStruct((n, f), out_dtype),
        grid=(n // tm, n // tk),
        in_specs=[
            pl.BlockSpec((tm, tk), lambda i, k: (i, k)),   # A_hat tile
            pl.BlockSpec((tk, f), lambda i, k: (k, 0)),    # H row-slab (full F)
            pl.BlockSpec((1, f), lambda i, k: (0, 0)),     # bias, fetched once
        ],
        out_specs=pl.BlockSpec((tm, f), lambda i, k: (i, 0)),
        scratch_shapes=[pltpu.VMEM((tm, f), jnp.float32)],
        compiler_params=pltpu.CompilerParams(
            dimension_semantics=("parallel", "arbitrary"),
            vmem_limit_bytes=_vmem_limit(
                tm * tk * 2, tk * f * 2, f * 4, tm * f * 4, tm * f * out_bytes,
            ),
        ),
    )(a_hat, h, b)


@jax.jit
def gcn_forward_tiled(params, x_pad, a_hat_pad):
    n = a_hat_pad.shape[0]
    # Avoid tile collapse to 128 on awkward N (e.g. 896): re-pad N to a
    # multiple of the preferred tile when more than one row tile is needed.
    n_t = _round_up(n, N_TILE_PREF) if n > N_TILE_PREF else n
    if n_t != n:
        a = _pad_to(a_hat_pad, (n_t, n_t))
        x = _pad_to(x_pad, (n_t, x_pad.shape[1]))
    else:
        a, x = a_hat_pad, x_pad

    # layer 1: GCNConv + ReLU
    h = feature_transform(x, params["w1"])
    h = aggregate(a, h, params["b1"], apply_relu=True, out_dtype=jnp.bfloat16)
    # layer 2: GCNConv + ReLU
    h = feature_transform(h, params["w2"])
    h = aggregate(a, h, params["b2"], apply_relu=True, out_dtype=jnp.bfloat16)
    # layer 3: GCNConv (no activation)
    h = feature_transform(h, params["w3"])
    out = aggregate(a, h, params["b3"], apply_relu=False, out_dtype=jnp.float32)
    return out[:n]


# ------------------------------ dispatcher ---------------------------------

def gcn_forward(params, x_pad, a_hat_pad, *, force_tiled=False):
    """Pick the fully fused single-call path when everything fits in VMEM."""
    n = a_hat_pad.shape[0]
    est = _fused_vmem_estimate(
        n, x_pad.shape[1], params["w1"].shape[1], params["w3"].shape[1]
    )
    if not force_tiled and est <= _vmem_capacity_bytes() // 2:
        return gcn_forward_fused(params, x_pad, a_hat_pad)
    return gcn_forward_tiled(params, x_pad, a_hat_pad)


# ------------------------------- GCN glue -----------------------------------

def build_normalized_adjacency(edge_index, num_nodes):
    """Dense D^{-1/2}(A + I)D^{-1/2} matching GCNConv gcn_norm (glue, not kernel)."""
    src = edge_index[0]
    dst = edge_index[1]
    a = jnp.zeros((num_nodes, num_nodes), jnp.float32)
    a = a.at[dst, src].add(1.0)                      # scatter-add (dup edges accumulate)
    a = a + jnp.eye(num_nodes, dtype=jnp.float32)    # self loops
    deg = jnp.sum(a, axis=1)
    d_inv_sqrt = jnp.where(deg > 0, 1.0 / jnp.sqrt(deg), 0.0)
    return a * d_inv_sqrt[:, None] * d_inv_sqrt[None, :]


def glorot(key, shape):
    fan_in, fan_out = shape
    limit = jnp.sqrt(6.0 / (fan_in + fan_out))
    return jax.random.uniform(key, shape, jnp.float32, -limit, limit)


def _pad2(x, rows, cols):
    return jnp.zeros((rows, cols), jnp.float32).at[: x.shape[0], : x.shape[1]].set(x)


def init_gcn_params(key, input_dim, output_dim):
    hidden = input_dim * 2
    f_in_p = _round_up(input_dim, LANE)
    f_h_p = _round_up(hidden, LANE)
    f_out_p = _round_up(output_dim, LANE)
    k1, k2, k3 = jax.random.split(key, 3)
    return {
        "w1": _pad2(glorot(k1, (input_dim, hidden)), f_in_p, f_h_p).astype(jnp.bfloat16),
        "b1": jnp.zeros((1, f_h_p), jnp.float32),
        "w2": _pad2(glorot(k2, (hidden, hidden)), f_h_p, f_h_p).astype(jnp.bfloat16),
        "b2": jnp.zeros((1, f_h_p), jnp.float32),
        "w3": _pad2(glorot(k3, (hidden, output_dim)), f_h_p, f_out_p).astype(jnp.bfloat16),
        "b3": jnp.zeros((1, f_out_p), jnp.float32),
    }


def gcn_reference(params, x_pad, a_hat_pad):
    """Pure-JAX reference mirroring the kernels' bf16-input / f32-accumulate math."""
    bf16, f32 = jnp.bfloat16, jnp.float32

    def layer(h, w, b, relu):
        t = jnp.dot(h.astype(bf16), w, preferred_element_type=f32)
        t = jnp.dot(a_hat_pad, t.astype(bf16), preferred_element_type=f32) + b
        return jnp.maximum(t, 0.0) if relu else t

    h = layer(x_pad, params["w1"], params["b1"], True)
    h = layer(h, params["w2"], params["b2"], True)
    h = layer(h, params["w3"], params["b3"], False)
    return h


# --------------------------------- main -------------------------------------

if __name__ == "__main__":
    key = jax.random.PRNGKey(0)
    k_x, k_e, k_p = jax.random.split(key, 3)

    num_nodes = 16
    input_dim = 8
    output_dim = 4
    num_edges = 32

    # node features [N, F_in]
    x = jax.random.normal(k_x, (num_nodes, input_dim), jnp.float32)
    # random directed edges source->target, [2, E]
    edge_index = jax.random.randint(
        k_e, (2, num_edges), 0, num_nodes, dtype=jnp.int32
    )

    a_hat = build_normalized_adjacency(edge_index, num_nodes)

    # Pad N and feature dims to multiples of 128 (lane-dense, MXU-friendly).
    n_pad = _round_up(num_nodes, LANE)
    f_in_pad = _round_up(input_dim, LANE)
    a_hat_pad = (
        jnp.zeros((n_pad, n_pad), jnp.float32)
        .at[:num_nodes, :num_nodes]
        .set(a_hat)
        .astype(jnp.bfloat16)
    )
    x_pad = (
        jnp.zeros((n_pad, f_in_pad), jnp.float32)
        .at[:num_nodes, :input_dim]
        .set(x)
        .astype(jnp.bfloat16)
    )

    params = init_gcn_params(k_p, input_dim, output_dim)

    # Fused single-call path (used at this size) + tiled fallback path, both
    # checked against a pure-JAX reference with matching quantization points.
    ref = gcn_reference(params, x_pad, a_hat_pad)[:num_nodes, :output_dim]

    out_pad = gcn_forward(params, x_pad, a_hat_pad)
    out = out_pad[:num_nodes, :output_dim]
    jax.block_until_ready(out)

    out_tiled = gcn_forward(params, x_pad, a_hat_pad, force_tiled=True)
    out_tiled = out_tiled[:num_nodes, :output_dim]
    jax.block_until_ready(out_tiled)

    assert out.shape == (num_nodes, output_dim), out.shape
    assert bool(jnp.all(jnp.isfinite(out)))
    assert bool(jnp.allclose(out, ref, rtol=5e-2, atol=5e-2)), "fused mismatch"
    assert bool(jnp.allclose(out_tiled, ref, rtol=5e-2, atol=5e-2)), "tiled mismatch"
    print("KERNEL_OK")
</pallas_src>

<mosaic_0001>
module attributes {stable_mosaic.version = 11 : i64} {
  func.func @gcn_fused_kernel(%arg0: memref<128x128xbf16, #tpu.memory_space<vmem>>, %arg1: memref<128x128xbf16, #tpu.memory_space<vmem>>, %arg2: memref<128x128xbf16, #tpu.memory_space<vmem>>, %arg3: memref<1x128xf32, #tpu.memory_space<vmem>>, %arg4: memref<128x128xbf16, #tpu.memory_space<vmem>>, %arg5: memref<1x128xf32, #tpu.memory_space<vmem>>, %arg6: memref<128x128xbf16, #tpu.memory_space<vmem>>, %arg7: memref<1x128xf32, #tpu.memory_space<vmem>>, %arg8: memref<128x128xf32, #tpu.memory_space<vmem>>) attributes {dimension_semantics = [], scalar_prefetch = 0 : i64, scratch_operands = 0 : i64, tpu.core_type = #tpu.core_type<tc>} {
    %c0 = arith.constant 0 : index
    %c0_0 = arith.constant 0 : index
    %0 = vector.load %arg0[%c0, %c0_0] : memref<128x128xbf16, #tpu.memory_space<vmem>>, vector<128x128xbf16>
    %c0_1 = arith.constant 0 : index
    %c0_2 = arith.constant 0 : index
    %1 = vector.load %arg1[%c0_1, %c0_2] : memref<128x128xbf16, #tpu.memory_space<vmem>>, vector<128x128xbf16>
    %c0_3 = arith.constant 0 : index
    %c0_4 = arith.constant 0 : index
    %2 = vector.load %arg2[%c0_3, %c0_4] : memref<128x128xbf16, #tpu.memory_space<vmem>>, vector<128x128xbf16>
    %cst = arith.constant dense<0.000000e+00> : vector<128x128xf32>
    %3 = tpu.matmul %1, %2, %cst {dimension_numbers = #tpu.dot_dimension_numbers<[1], [0], [0], [1], [0, 0, 1, 1], [], []>} : vector<128x128xbf16>, vector<128x128xbf16>, vector<128x128xf32> -> vector<128x128xf32>
    %4 = arith.truncf %3 : vector<128x128xf32> to vector<128x128xbf16>
    %cst_5 = arith.constant dense<0.000000e+00> : vector<128x128xf32>
    %5 = tpu.matmul %0, %4, %cst_5 {dimension_numbers = #tpu.dot_dimension_numbers<[1], [0], [0], [1], [0, 0, 1, 1], [], []>} : vector<128x128xbf16>, vector<128x128xbf16>, vector<128x128xf32> -> vector<128x128xf32>
    %c0_6 = arith.constant 0 : index
    %c0_7 = arith.constant 0 : index
    %6 = vector.load %arg3[%c0_6, %c0_7] : memref<1x128xf32, #tpu.memory_space<vmem>>, vector<1x128xf32>
    %7 = vector.broadcast %6 : vector<1x128xf32> to vector<128x128xf32>
    %8 = arith.addf %5, %7 : vector<128x128xf32>
    %cst_8 = arith.constant 0.000000e+00 : f32
    %9 = vector.broadcast %cst_8 : f32 to vector<128x128xf32>
    %10 = arith.maximumf %8, %9 : vector<128x128xf32>
    %11 = arith.truncf %10 : vector<128x128xf32> to vector<128x128xbf16>
    %c0_9 = arith.constant 0 : index
    %c0_10 = arith.constant 0 : index
    %12 = vector.load %arg4[%c0_9, %c0_10] : memref<128x128xbf16, #tpu.memory_space<vmem>>, vector<128x128xbf16>
    %cst_11 = arith.constant dense<0.000000e+00> : vector<128x128xf32>
    %13 = tpu.matmul %11, %12, %cst_11 {dimension_numbers = #tpu.dot_dimension_numbers<[1], [0], [0], [1], [0, 0, 1, 1], [], []>} : vector<128x128xbf16>, vector<128x128xbf16>, vector<128x128xf32> -> vector<128x128xf32>
    %14 = arith.truncf %13 : vector<128x128xf32> to vector<128x128xbf16>
    %cst_12 = arith.constant dense<0.000000e+00> : vector<128x128xf32>
    %15 = tpu.matmul %0, %14, %cst_12 {dimension_numbers = #tpu.dot_dimension_numbers<[1], [0], [0], [1], [0, 0, 1, 1], [], []>} : vector<128x128xbf16>, vector<128x128xbf16>, vector<128x128xf32> -> vector<128x128xf32>
    %c0_13 = arith.constant 0 : index
    %c0_14 = arith.constant 0 : index
    %16 = vector.load %arg5[%c0_13, %c0_14] : memref<1x128xf32, #tpu.memory_space<vmem>>, vector<1x128xf32>
    %17 = vector.broadcast %16 : vector<1x128xf32> to vector<128x128xf32>
    %18 = arith.addf %15, %17 : vector<128x128xf32>
    %cst_15 = arith.constant 0.000000e+00 : f32
    %19 = vector.broadcast %cst_15 : f32 to vector<128x128xf32>
    %20 = arith.maximumf %18, %19 : vector<128x128xf32>
    %21 = arith.truncf %20 : vector<128x128xf32> to vector<128x128xbf16>
    %c0_16 = arith.constant 0 : index
    %c0_17 = arith.constant 0 : index
    %22 = vector.load %arg6[%c0_16, %c0_17] : memref<128x128xbf16, #tpu.memory_space<vmem>>, vector<128x128xbf16>
    %cst_18 = arith.constant dense<0.000000e+00> : vector<128x128xf32>
    %23 = tpu.matmul %21, %22, %cst_18 {dimension_numbers = #tpu.dot_dimension_numbers<[1], [0], [0], [1], [0, 0, 1, 1], [], []>} : vector<128x128xbf16>, vector<128x128xbf16>, vector<128x128xf32> -> vector<128x128xf32>
    %24 = arith.truncf %23 : vector<128x128xf32> to vector<128x128xbf16>
    %cst_19 = arith.constant dense<0.000000e+00> : vector<128x128xf32>
    %25 = tpu.matmul %0, %24, %cst_19 {dimension_numbers = #tpu.dot_dimension_numbers<[1], [0], [0], [1], [0, 0, 1, 1], [], []>} : vector<128x128xbf16>, vector<128x128xbf16>, vector<128x128xf32> -> vector<128x128xf32>
    %c0_20 = arith.constant 0 : index
    %c0_21 = arith.constant 0 : index
    %26 = vector.load %arg7[%c0_20, %c0_21] : memref<1x128xf32, #tpu.memory_space<vmem>>, vector<1x128xf32>
    %27 = vector.broadcast %26 : vector<1x128xf32> to vector<128x128xf32>
    %28 = arith.addf %25, %27 : vector<128x128xf32>
    %c0_22 = arith.constant 0 : index
    %c0_23 = arith.constant 0 : index
    %29 = vector.load %arg8[%c0_22, %c0_23] : memref<128x128xf32, #tpu.memory_space<vmem>>, vector<128x128xf32>
    tpu.vector_store %arg8[%c0_22, %c0_23], %28 {strides = array<i32>} : memref<128x128xf32, #tpu.memory_space<vmem>>, vector<128x128xf32>,
    return
  }
}

</mosaic_0001>

<llo_original>
// kernel: gcn_forward_fused.1
$region0: #{gcn_forward_fused.1}
  #allocation0 [shape = 'u32[]', space=smem, size = 0x4, offset = 0x4, fixed_abs, tag = 'smem constant byte address 0x4 - core index']
  #allocation1 [shape = 'u32[144,128]{1,0:T(1,128)}', space=vmem, size = 0x12000, scoped, tag = 'internal scratch']
  %s0 = inlined_call_operand.hbm [shape: bf16[128,128], index: 0, kind: input, shape index: {}]
  %s1 = inlined_call_operand.hbm [shape: bf16[128,128], index: 1, kind: input, shape index: {}]
  %s2 = inlined_call_operand.hbm [shape: bf16[128,128], index: 2, kind: input, shape index: {}]
  %s3 = inlined_call_operand.hbm [shape: f32[1,128], index: 3, kind: input, shape index: {}]
  %s4 = inlined_call_operand.hbm [shape: bf16[128,128], index: 4, kind: input, shape index: {}]
  %s5 = inlined_call_operand.vmem [shape: f32[1,128], index: 5, kind: input, shape index: {}]
  %s6 = inlined_call_operand.hbm [shape: bf16[128,128], index: 6, kind: input, shape index: {}]
  %s7 = inlined_call_operand.vmem [shape: f32[1,128], index: 7, kind: input, shape index: {}]
  %s8 = inlined_call_operand.hbm [shape: f32[128,128], index: 8, kind: output, shape index: {}]
  %s9 = sld [smem:[#allocation0]]
  $region66: #{gcn_forward_fused.1} parent=0
    _
  %s11 = ssub.s32 1, %s9
  %s12 = scalar_select 0, %s11, %s9
  $region1: #{gcn_forward_fused.1} parent=0
    #allocation2 [shape = 'u8[32768]{0}', space=vmem, size = 0x8000, scoped, tag = 'input window, operand 0, single buffered']
    #allocation3 [shape = 's32[1]{0}', space=sflag, size = 0x4, scoped, tag = 'scoped memory for gcn_forward_fused.1']
    #allocation4 [shape = 's32[1]{0}', space=sflag, size = 0x4, scoped, tag = 'scoped memory for gcn_forward_fused.1']
    #allocation5 [shape = 'u8[32768]{0}', space=vmem, size = 0x8000, scoped, tag = 'input window, operand 1, single buffered']
    #allocation6 [shape = 's32[1]{0}', space=sflag, size = 0x4, scoped, tag = 'scoped memory for gcn_forward_fused.1']
    #allocation7 [shape = 'u8[32768]{0}', space=vmem, size = 0x8000, scoped, tag = 'input window, operand 2, single buffered']
    #allocation8 [shape = 'u8[512]{0}', space=vmem, size = 0x400, scoped, tag = 'input window, operand 3, single buffered']
    #allocation9 [shape = 's32[1]{0}', space=sflag, size = 0x4, scoped, tag = 'scoped memory for gcn_forward_fused.1']
    #allocation10 [shape = 'u8[32768]{0}', space=vmem, size = 0x8000, scoped, tag = 'input window, operand 4, single buffered']
    #allocation11 [shape = 'u8[32768]{0}', space=vmem, size = 0x8000, scoped, tag = 'input window, operand 6, single buffered']
    #allocation12 [shape = 's32[1]{0}', space=sflag, size = 0x4, scoped, tag = 'scoped memory for gcn_forward_fused.1']
    #allocation13 [shape = 'u8[65536]{0}', space=vmem, size = 0x10000, scoped, tag = 'output window, operand 0, single buffered']
    %13 = vsyncpa [#allocation3], 0
    %14 = vsyncpa [#allocation6], 0
    %15 = vsyncpa [#allocation9], 0
    %16 = vsyncpa [#allocation12], 0
    %17 = vsyncpa [#allocation4], 0
    // Predicated region
    $region2: #{gcn_forward_fused.1} parent=1 // pred_check
      _
    $region3: #{gcn_forward_fused.1} parent=1 // pred_check_branch
      %19 = sbr.rel (0) target = $region5
    $region4: #{gcn_forward_fused.1} parent=1 // pred_region
      %s21 = ssub.s32 1024, 1024
      %22 = vsyncadd [#allocation3], %s21
      %s23 = sshll.u32 [#allocation2], 4
      %s24 = int_to_ptr.vmem [resolvable:$true] %s23
      %29 = dma.hbm_to_vmem [thread:$0]  %s0, 1024, %s24, [#allocation3], 64, 64, 4
    $region5: #{gcn_forward_fused.1} parent=1 // pred_fallthru
      _
    // Predicated region
    $region6: #{gcn_forward_fused.1} parent=1 // pred_check
      _
    $region7: #{gcn_forward_fused.1} parent=1 // pred_check_branch
      %31 = sbr.rel (0) target = $region9
    $region8: #{gcn_forward_fused.1} parent=1 // pred_region
      %s33 = ssub.s32 1024, 1024
      %34 = vsyncadd [#allocation6], %s33
      %s35 = sshll.u32 [#allocation5], 4
      %s36 = int_to_ptr.vmem [resolvable:$true] %s35
      %41 = dma.hbm_to_vmem [thread:$0]  %s1, 1024, %s36, [#allocation6], 64, 64, 4
    $region9: #{gcn_forward_fused.1} parent=1 // pred_fallthru
      _
    // Predicated region
    $region10: #{gcn_forward_fused.1} parent=1 // pred_check
      _
    $region11: #{gcn_forward_fused.1} parent=1 // pred_check_branch
      %43 = sbr.rel (0) target = $region13
    $region12: #{gcn_forward_fused.1} parent=1 // pred_region
      %s45 = ssub.s32 1024, 1024
      %46 = vsyncadd [#allocation6], %s45
      %s47 = sshll.u32 [#allocation7], 4
      %s48 = int_to_ptr.vmem [resolvable:$true] %s47
      %53 = dma.hbm_to_vmem [thread:$0]  %s2, 1024, %s48, [#allocation6], 64, 64, 4
    $region13: #{gcn_forward_fused.1} parent=1 // pred_fallthru
      _
    // Predicated region
    $region14: #{gcn_forward_fused.1} parent=1 // pred_check
      _
    $region15: #{gcn_forward_fused.1} parent=1 // pred_check_branch
      %55 = sbr.rel (0) target = $region17
    $region16: #{gcn_forward_fused.1} parent=1 // pred_region
      %s57 = ssub.s32 16, 16
      %58 = vsyncadd [#allocation9], %s57
      %s60 = sshll.u32 [#allocation8], 4
      %s61 = int_to_ptr.vmem [resolvable:$true] %s60
      %63 = dma.hbm_to_vmem [thread:$0]  %s3, 16, %s61, [#allocation9]
    $region17: #{gcn_forward_fused.1} parent=1 // pred_fallthru
      _
    // Predicated region
    $region18: #{gcn_forward_fused.1} parent=1 // pred_check
      _
    $region19: #{gcn_forward_fused.1} parent=1 // pred_check_branch
      %65 = sbr.rel (0) target = $region21
    $region20: #{gcn_forward_fused.1} parent=1 // pred_region
      %s67 = ssub.s32 1024, 1024
      %68 = vsyncadd [#allocation9], %s67
      %s69 = sshll.u32 [#allocation10], 4
      %s70 = int_to_ptr.vmem [resolvable:$true] %s69
      %75 = dma.hbm_to_vmem [thread:$0]  %s4, 1024, %s70, [#allocation9], 64, 64, 4
    $region21: #{gcn_forward_fused.1} parent=1 // pred_fallthru
      _
    // Predicated region
    $region22: #{gcn_forward_fused.1} parent=1 // pred_check
      _
    $region23: #{gcn_forward_fused.1} parent=1 // pred_check_branch
      %77 = sbr.rel (0) target = $region25
    $region24: #{gcn_forward_fused.1} parent=1 // pred_region
      _
    $region25: #{gcn_forward_fused.1} parent=1 // pred_fallthru
      _
    // Predicated region
    $region26: #{gcn_forward_fused.1} parent=1 // pred_check
      _
    $region27: #{gcn_forward_fused.1} parent=1 // pred_check_branch
      %79 = sbr.rel (0) target = $region29
    $region28: #{gcn_forward_fused.1} parent=1 // pred_region
      %s81 = ssub.s32 1024, 1024
      %82 = vsyncadd [#allocation12], %s81
      %s83 = sshll.u32 [#allocation11], 4
      %s84 = int_to_ptr.vmem [resolvable:$true] %s83
      %89 = dma.hbm_to_vmem [thread:$0]  %s6, 1024, %s84, [#allocation12], 64, 64, 4
    $region29: #{gcn_forward_fused.1} parent=1 // pred_fallthru
      _
    // Predicated region
    $region30: #{gcn_forward_fused.1} parent=1 // pred_check
      _
    $region31: #{gcn_forward_fused.1} parent=1 // pred_check_branch
      %91 = sbr.rel (0) target = $region33
    $region32: #{gcn_forward_fused.1} parent=1 // pred_region
      _
    $region33: #{gcn_forward_fused.1} parent=1 // pred_fallthru
      _
    // Predicated region
    $region34: #{gcn_forward_fused.1} parent=1 // pred_check
      _
    $region35: #{gcn_forward_fused.1} parent=1 // pred_check_branch
      %93 = sbr.rel (0) target = $region37
    $region36: #{gcn_forward_fused.1} parent=1 // pred_region
      %94 = dma.done [#allocation3], 1024
    $region37: #{gcn_forward_fused.1} parent=1 // pred_fallthru
      _
    // Predicated region
    $region38: #{gcn_forward_fused.1} parent=1 // pred_check
      _
    $region39: #{gcn_forward_fused.1} parent=1 // pred_check_branch
      %96 = sbr.rel (0) target = $region41
    $region40: #{gcn_forward_fused.1} parent=1 // pred_region
      %97 = dma.done [#allocation6], 1024
    $region41: #{gcn_forward_fused.1} parent=1 // pred_fallthru
      _
    // Predicated region
    $region42: #{gcn_forward_fused.1} parent=1 // pred_check
      _
    $region43: #{gcn_forward_fused.1} parent=1 // pred_check_branch
      %99 = sbr.rel (0) target = $region45
    $region44: #{gcn_forward_fused.1} parent=1 // pred_region
      %100 = dma.done [#allocation6], 1024
    $region45: #{gcn_forward_fused.1} parent=1 // pred_fallthru
      _
    // Predicated region
    $region46: #{gcn_forward_fused.1} parent=1 // pred_check
      _
    $region47: #{gcn_forward_fused.1} parent=1 // pred_check_branch
      %102 = sbr.rel (0) target = $region49
    $region48: #{gcn_forward_fused.1} parent=1 // pred_region
      %103 = dma.done [#allocation9], 16
    $region49: #{gcn_forward_fused.1} parent=1 // pred_fallthru
      _
    // Predicated region
    $region50: #{gcn_forward_fused.1} parent=1 // pred_check
      _
    $region51: #{gcn_forward_fused.1} parent=1 // pred_check_branch
      %105 = sbr.rel (0) target = $region53
    $region52: #{gcn_forward_fused.1} parent=1 // pred_region
      %106 = dma.done [#allocation9], 1024
    $region53: #{gcn_forward_fused.1} parent=1 // pred_fallthru
      _
    // Predicated region
    $region54: #{gcn_forward_fused.1} parent=1 // pred_check
      _
    $region55: #{gcn_forward_fused.1} parent=1 // pred_check_branch
      %108 = sbr.rel (0) target = $region57
    $region56: #{gcn_forward_fused.1} parent=1 // pred_region
      %109 = dma.done [#allocation12], 1024
    $region57: #{gcn_forward_fused.1} parent=1 // pred_fallthru
      _
    %v111 = vld [vmem:[#allocation2] sm:$0xf]
    %v112 = vld [vmem:[#allocation2 + $0x4] sm:$0xf]
    %v113 = vld [vmem:[#allocation2 + $0x8] sm:$0xf]
    %v114 = vld [vmem:[#allocation2 + $0xc] sm:$0xf]
    %v115 = vld [vmem:[#allocation2 + $0x10] sm:$0xf]
    %v116 = vld [vmem:[#allocation2 + $0x14] sm:$0xf]
    %v117 = vld [vmem:[#allocation2 + $0x18] sm:$0xf]
    %v118 = vld [vmem:[#allocation2 + $0x1c] sm:$0xf]
    %v119 = vld [vmem:[#allocation2 + $0x20] sm:$0xf]
    %v120 = vld [vmem:[#allocation2 + $0x24] sm:$0xf]
    %v121 = vld [vmem:[#allocation2 + $0x28] sm:$0xf]
    %v122 = vld [vmem:[#allocation2 + $0x2c] sm:$0xf]
    %v123 = vld [vmem:[#allocation2 + $0x30] sm:$0xf]
    %v124 = vld [vmem:[#allocation2 + $0x34] sm:$0xf]
    %v125 = vld [vmem:[#allocation2 + $0x38] sm:$0xf]
    %v126 = vld [vmem:[#allocation2 + $0x3c] sm:$0xf]
    %v127 = vld [vmem:[#allocation5] sm:$0xf]
    %v128 = vld [vmem:[#allocation5 + $0x4] sm:$0xf]
    %v129 = vld [vmem:[#allocation5 + $0x8] sm:$0xf]
    %v130 = vld [vmem:[#allocation5 + $0xc] sm:$0xf]
    %v131 = vld [vmem:[#allocation5 + $0x10] sm:$0xf]
    %v132 = vld [vmem:[#allocation5 + $0x14] sm:$0xf]
    %v133 = vld [vmem:[#allocation5 + $0x18] sm:$0xf]
    %v134 = vld [vmem:[#allocation5 + $0x1c] sm:$0xf]
    %v135 = vld [vmem:[#allocation5 + $0x20] sm:$0xf]
    %v136 = vld [vmem:[#allocation5 + $0x24] sm:$0xf]
    %v137 = vld [vmem:[#allocation5 + $0x28] sm:$0xf]
    %v138 = vld [vmem:[#allocation5 + $0x2c] sm:$0xf]
    %v139 = vld [vmem:[#allocation5 + $0x30] sm:$0xf]
    %v140 = vld [vmem:[#allocation5 + $0x34] sm:$0xf]
    %v141 = vld [vmem:[#allocation5 + $0x38] sm:$0xf]
    %v142 = vld [vmem:[#allocation5 + $0x3c] sm:$0xf]
    %v143 = vld [vmem:[#allocation7] sm:$0xf]
    %v144 = vld [vmem:[#allocation7 + $0x4] sm:$0xf]
    %v145 = vld [vmem:[#allocation7 + $0x8] sm:$0xf]
    %v146 = vld [vmem:[#allocation7 + $0xc] sm:$0xf]
    %v147 = vld [vmem:[#allocation7 + $0x10] sm:$0xf]
    %v148 = vld [vmem:[#allocation7 + $0x14] sm:$0xf]
    %v149 = vld [vmem:[#allocation7 + $0x18] sm:$0xf]
    %v150 = vld [vmem:[#allocation7 + $0x1c] sm:$0xf]
    %v151 = vld [vmem:[#allocation7 + $0x20] sm:$0xf]
    %v152 = vld [vmem:[#allocation7 + $0x24] sm:$0xf]
    %v153 = vld [vmem:[#allocation7 + $0x28] sm:$0xf]
    %v154 = vld [vmem:[#allocation7 + $0x2c] sm:$0xf]
    %v155 = vld [vmem:[#allocation7 + $0x30] sm:$0xf]
    %v156 = vld [vmem:[#allocation7 + $0x34] sm:$0xf]
    %v157 = vld [vmem:[#allocation7 + $0x38] sm:$0xf]
    %v158 = vld [vmem:[#allocation7 + $0x3c] sm:$0xf]
    %v175 = vunpack.c.l.b16 %v127
    %v176 = vunpack.c.l.b16 %v128
    %v177 = vunpack.c.l.b16 %v129
    %v178 = vunpack.c.l.b16 %v130
    %v179 = vunpack.c.l.b16 %v131
    %v180 = vunpack.c.l.b16 %v132
    %v181 = vunpack.c.l.b16 %v133
    %v182 = vunpack.c.l.b16 %v134
    %v183 = vunpack.c.l.b16 %v135
    %v184 = vunpack.c.l.b16 %v136
    %v185 = vunpack.c.l.b16 %v137
    %v186 = vunpack.c.l.b16 %v138
    %v187 = vunpack.c.l.b16 %v139
    %v188 = vunpack.c.l.b16 %v140
    %v189 = vunpack.c.l.b16 %v141
    %v190 = vunpack.c.l.b16 %v142
    %v191 = vpack.c.b16 %v176, %v175
    %v192 = vpack.c.b16 %v178, %v177
    %v193 = vpack.c.b16 %v180, %v179
    %v194 = vpack.c.b16 %v182, %v181
    %v195 = vpack.c.b16 %v184, %v183
    %v196 = vpack.c.b16 %v186, %v185
    %v197 = vpack.c.b16 %v188, %v187
    %v198 = vpack.c.b16 %v190, %v189
    %v223 = vunpack.c.l.b16 %v143
    %v224 = vunpack.c.l.b16 %v144
    %v225 = vunpack.c.l.b16 %v145
    %v226 = vunpack.c.l.b16 %v146
    %v227 = vunpack.c.l.b16 %v147
    %v228 = vunpack.c.l.b16 %v148
    %v229 = vunpack.c.l.b16 %v149
    %v230 = vunpack.c.l.b16 %v150
    %v231 = vunpack.c.l.b16 %v151
    %v232 = vunpack.c.l.b16 %v152
    %v233 = vunpack.c.l.b16 %v153
    %v234 = vunpack.c.l.b16 %v154
    %v235 = vunpack.c.l.b16 %v155
    %v236 = vunpack.c.l.b16 %v156
    %v237 = vunpack.c.l.b16 %v157
    %v238 = vunpack.c.l.b16 %v158
    %v239 = vpack.c.b16 %v224, %v223
    %v240 = vpack.c.b16 %v226, %v225
    %v241 = vpack.c.b16 %v228, %v227
    %v242 = vpack.c.b16 %v230, %v229
    %v243 = vpack.c.b16 %v232, %v231
    %v244 = vpack.c.b16 %v234, %v233
    %v245 = vpack.c.b16 %v236, %v235
    %v246 = vpack.c.b16 %v238, %v237
    %255 = vmatprep.subr.bf16.mxu0 0
    %256 = vmatpush1.bf16.msra.mxu0 %v239
    %257 = vmatprep.subr.bf16.mxu0 0
    %258 = vmatpush1.bf16.msra.mxu0 %v240
    %259 = vmatprep.subr.bf16.mxu0 0
    %260 = vmatpush1.bf16.msra.mxu0 %v241
    %261 = vmatprep.subr.bf16.mxu0 0
    %262 = vmatpush1.bf16.msra.mxu0 %v242
    %263 = vmatprep.subr.bf16.mxu0 0
    %264 = vmatpush1.bf16.msra.mxu0 %v243
    %265 = vmatprep.subr.bf16.mxu0 0
    %266 = vmatpush1.bf16.msra.mxu0 %v244
    %267 = vmatprep.subr.bf16.mxu0 0
    %268 = vmatpush1.bf16.msra.mxu0 %v245
    %269 = vmatprep.subr.bf16.mxu0 0
    %270 = vmatpush1.bf16.msra.mxu0 %v246
    %271 = vmatprep.subr.bf16.mxu0 0
    %272 = vmatpush1.bf16.msra.mxu0 0
    %273 = vmatprep.subr.bf16.mxu0 0
    %274 = vmatpush1.bf16.msra.mxu0 0
    %275 = vmatprep.subr.bf16.mxu0 0
    %276 = vmatpush1.bf16.msra.mxu0 0
    %277 = vmatprep.subr.bf16.mxu0 0
    %278 = vmatpush1.bf16.msra.mxu0 0
    %279 = vmatprep.subr.bf16.mxu0 0
    %280 = vmatpush1.bf16.msra.mxu0 0
    %281 = vmatprep.subr.bf16.mxu0 0
    %282 = vmatpush1.bf16.msra.mxu0 0
    %283 = vmatprep.subr.bf16.mxu0 0
    %284 = vmatpush1.bf16.msra.mxu0 0
    %285 = vmatprep.subr.bf16.mxu0 0
    %286 = vmatpush1.bf16.msra.mxu0 0
    %287 = vmatprep.mubr.bf16.mxu0 0
    %288 = vmatmul.mubr.bf16.gmra.mrb[0].mxu0 %v191
    %v289 = vpop.f32.mrb[0].mxu0
    %v290 = vadd.f32 0.0, %v289
    %v291 = vpop.f32.mrb[0].mxu0
    %v292 = vpop.f32.mrb[0].mxu0
    %v293 = vadd.f32 0.0, %v292
    %v294 = vpop.f32.mrb[0].mxu0
    %295 = vmatprep.mubr.bf16.mxu0 0
    %296 = vmatmul.mubr.bf16.gmra.mrb[0].mxu0 %v192
    %v297 = vpop.f32.mrb[0].mxu0
    %v298 = vadd.f32 0.0, %v297
    %v299 = vpop.f32.mrb[0].mxu0
    %v300 = vpop.f32.mrb[0].mxu0
    %v301 = vadd.f32 0.0, %v300
    %v302 = vpop.f32.mrb[0].mxu0
    %303 = vmatprep.mubr.bf16.mxu0 0
    %304 = vmatmul.mubr.bf16.gmra.mrb[0].mxu0 %v193
    %v305 = vpop.f32.mrb[0].mxu0
    %v306 = vadd.f32 0.0, %v305
    %v307 = vpop.f32.mrb[0].mxu0
    %v308 = vpop.f32.mrb[0].mxu0
    %v309 = vadd.f32 0.0, %v308
    %v310 = vpop.f32.mrb[0].mxu0
    %311 = vmatprep.mubr.bf16.mxu0 0
    %312 = vmatmul.mubr.bf16.gmra.mrb[0].mxu0 %v194
    %v313 = vpop.f32.mrb[0].mxu0
    %v314 = vadd.f32 0.0, %v313
    %v315 = vpop.f32.mrb[0].mxu0
    %v316 = vpop.f32.mrb[0].mxu0
    %v317 = vadd.f32 0.0, %v316
    %v318 = vpop.f32.mrb[0].mxu0
    %319 = vmatprep.mubr.bf16.mxu0 0
    %320 = vmatmul.mubr.bf16.gmra.mrb[0].mxu0 %v195
    %v321 = vpop.f32.mrb[0].mxu0
    %v322 = vadd.f32 0.0, %v321
    %v323 = vpop.f32.mrb[0].mxu0
    %v324 = vpop.f32.mrb[0].mxu0
    %v325 = vadd.f32 0.0, %v324
    %v326 = vpop.f32.mrb[0].mxu0
    %327 = vmatprep.mubr.bf16.mxu0 0
    %328 = vmatmul.mubr.bf16.gmra.mrb[0].mxu0 %v196
    %v329 = vpop.f32.mrb[0].mxu0
    %v330 = vadd.f32 0.0, %v329
    %v331 = vpop.f32.mrb[0].mxu0
    %v332 = vpop.f32.mrb[0].mxu0
    %v333 = vadd.f32 0.0, %v332
    %v334 = vpop.f32.mrb[0].mxu0
    %335 = vmatprep.mubr.bf16.mxu0 0
    %336 = vmatmul.mubr.bf16.gmra.mrb[0].mxu0 %v197
    %v337 = vpop.f32.mrb[0].mxu0
    %v338 = vadd.f32 0.0, %v337
    %v339 = vpop.f32.mrb[0].mxu0
    %v340 = vpop.f32.mrb[0].mxu0
    %v341 = vadd.f32 0.0, %v340
    %v342 = vpop.f32.mrb[0].mxu0
    %343 = vmatprep.mubr.bf16.mxu0 0
    %344 = vmatmul.mubr.bf16.gmra.mrb[0].mxu0 %v198
    %v345 = vpop.f32.mrb[0].mxu0
    %v346 = vadd.f32 0.0, %v345
    %v347 = vpop.f32.mrb[0].mxu0
    %v348 = vpop.f32.mrb[0].mxu0
    %v349 = vadd.f32 0.0, %v348
    %v350 = vpop.f32.mrb[0].mxu0
    %351 = vdwg.mxu0
    %v352 = vpack.c.bf16 %v293, %v290
    %v353 = vpack.c.bf16 %v301, %v298
    %v354 = vpack.c.bf16 %v309, %v306
    %v355 = vpack.c.bf16 %v317, %v314
    %v356 = vpack.c.bf16 %v325, %v322
    %v357 = vpack.c.bf16 %v333, %v330
    %v358 = vpack.c.bf16 %v341, %v338
    %v359 = vpack.c.bf16 %v349, %v346
    %v360 = vld [vmem:[#allocation8] sm:$0x1]
    %v362 = vlaneseq
    %v363 = vshrl.u32 %v362, 7
    %v364 = vsub.s32 0, %v363
    %v365 = vrot.slane %v360, %v364
    %v383 = vunpack.c.l.b16 %v111
    %v384 = vunpack.c.l.b16 %v112
    %v385 = vunpack.c.l.b16 %v113
    %v386 = vunpack.c.l.b16 %v114
    %v387 = vunpack.c.l.b16 %v115
    %v388 = vunpack.c.l.b16 %v116
    %v389 = vunpack.c.l.b16 %v117
    %v390 = vunpack.c.l.b16 %v118
    %v391 = vunpack.c.l.b16 %v119
    %v392 = vunpack.c.l.b16 %v120
    %v393 = vunpack.c.l.b16 %v121
    %v394 = vunpack.c.l.b16 %v122
    %v395 = vunpack.c.l.b16 %v123
    %v396 = vunpack.c.l.b16 %v124
    %v397 = vunpack.c.l.b16 %v125
    %v398 = vunpack.c.l.b16 %v126
    %v399 = vpack.c.b16 %v384, %v383
    %v400 = vpack.c.b16 %v386, %v385
    %v401 = vpack.c.b16 %v388, %v387
    %v402 = vpack.c.b16 %v390, %v389
    %v403 = vpack.c.b16 %v392, %v391
    %v404 = vpack.c.b16 %v394, %v393
    %v405 = vpack.c.b16 %v396, %v395
    %v406 = vpack.c.b16 %v398, %v397
    %415 = vmatprep.subr.bf16.mxu0 0
    %416 = vmatpush1.bf16.msra.mxu0 %v352
    %417 = vmatprep.subr.bf16.mxu0 0
    %418 = vmatpush1.bf16.msra.mxu0 %v353
    %419 = vmatprep.subr.bf16.mxu0 0
    %420 = vmatpush1.bf16.msra.mxu0 %v354
    %421 = vmatprep.subr.bf16.mxu0 0
    %422 = vmatpush1.bf16.msra.mxu0 %v355
    %423 = vmatprep.subr.bf16.mxu0 0
    %424 = vmatpush1.bf16.msra.mxu0 %v356
    %425 = vmatprep.subr.bf16.mxu0 0
    %426 = vmatpush1.bf16.msra.mxu0 %v357
    %427 = vmatprep.subr.bf16.mxu0 0
    %428 = vmatpush1.bf16.msra.mxu0 %v358
    %429 = vmatprep.subr.bf16.mxu0 0
    %430 = vmatpush1.bf16.msra.mxu0 %v359
    %431 = vmatprep.subr.bf16.mxu0 0
    %432 = vmatpush1.bf16.msra.mxu0 0
    %433 = vmatprep.subr.bf16.mxu0 0
    %434 = vmatpush1.bf16.msra.mxu0 0
    %435 = vmatprep.subr.bf16.mxu0 0
    %436 = vmatpush1.bf16.msra.mxu0 0
    %437 = vmatprep.subr.bf16.mxu0 0
    %438 = vmatpush1.bf16.msra.mxu0 0
    %439 = vmatprep.subr.bf16.mxu0 0
    %440 = vmatpush1.bf16.msra.mxu0 0
    %441 = vmatprep.subr.bf16.mxu0 0
    %442 = vmatpush1.bf16.msra.mxu0 0
    %443 = vmatprep.subr.bf16.mxu0 0
    %444 = vmatpush1.bf16.msra.mxu0 0
    %445 = vmatprep.subr.bf16.mxu0 0
    %446 = vmatpush1.bf16.msra.mxu0 0
    %447 = vmatprep.mubr.bf16.mxu0 0
    %448 = vmatmul.mubr.bf16.gmra.mrb[0].mxu0 %v399
    %v449 = vpop.f32.mrb[0].mxu0
    %v450 = vadd.f32 %v365, %v449
    %v451 = vpop.f32.mrb[0].mxu0
    %v452 = vpop.f32.mrb[0].mxu0
    %v453 = vadd.f32 %v365, %v452
    %v454 = vpop.f32.mrb[0].mxu0
    %455 = vmatprep.mubr.bf16.mxu0 0
    %456 = vmatmul.mubr.bf16.gmra.mrb[0].mxu0 %v400
    %v457 = vpop.f32.mrb[0].mxu0
    %v458 = vadd.f32 %v365, %v457
    %v459 = vpop.f32.mrb[0].mxu0
    %v460 = vpop.f32.mrb[0].mxu0
    %v461 = vadd.f32 %v365, %v460
    %v462 = vpop.f32.mrb[0].mxu0
    %463 = vmatprep.mubr.bf16.mxu0 0
    %464 = vmatmul.mubr.bf16.gmra.mrb[0].mxu0 %v401
    %v465 = vpop.f32.mrb[0].mxu0
    %v466 = vadd.f32 %v365, %v465
    %v467 = vpop.f32.mrb[0].mxu0
    %v468 = vpop.f32.mrb[0].mxu0
    %v469 = vadd.f32 %v365, %v468
    %v470 = vpop.f32.mrb[0].mxu0
    %471 = vmatprep.mubr.bf16.mxu0 0
    %472 = vmatmul.mubr.bf16.gmra.mrb[0].mxu0 %v402
    %v473 = vpop.f32.mrb[0].mxu0
    %v474 = vadd.f32 %v365, %v473
    %v475 = vpop.f32.mrb[0].mxu0
    %v476 = vpop.f32.mrb[0].mxu0
    %v477 = vadd.f32 %v365, %v476
    %v478 = vpop.f32.mrb[0].mxu0
    %479 = vmatprep.mubr.bf16.mxu0 0
    %480 = vmatmul.mubr.bf16.gmra.mrb[0].mxu0 %v403
    %v481 = vpop.f32.mrb[0].mxu0
    %v482 = vadd.f32 %v365, %v481
    %v483 = vpop.f32.mrb[0].mxu0
    %v484 = vpop.f32.mrb[0].mxu0
    %v485 = vadd.f32 %v365, %v484
    %v486 = vpop.f32.mrb[0].mxu0
    %487 = vmatprep.mubr.bf16.mxu0 0
    %488 = vmatmul.mubr.bf16.gmra.mrb[0].mxu0 %v404
    %v489 = vpop.f32.mrb[0].mxu0
    %v490 = vadd.f32 %v365, %v489
    %v491 = vpop.f32.mrb[0].mxu0
    %v492 = vpop.f32.mrb[0].mxu0
    %v493 = vadd.f32 %v365, %v492
    %v494 = vpop.f32.mrb[0].mxu0
    %495 = vmatprep.mubr.bf16.mxu0 0
    %496 = vmatmul.mubr.bf16.gmra.mrb[0].mxu0 %v405
    %v497 = vpop.f32.mrb[0].mxu0
    %v498 = vadd.f32 %v365, %v497
    %v499 = vpop.f32.mrb[0].mxu0
    %v500 = vpop.f32.mrb[0].mxu0
    %v501 = vadd.f32 %v365, %v500
    %v502 = vpop.f32.mrb[0].mxu0
    %503 = vmatprep.mubr.bf16.mxu0 0
    %504 = vmatmul.mubr.bf16.gmra.mrb[0].mxu0 %v406
    %v505 = vpop.f32.mrb[0].mxu0
    %v506 = vadd.f32 %v365, %v505
    %v507 = vpop.f32.mrb[0].mxu0
    %v508 = vpop.f32.mrb[0].mxu0
    %v509 = vadd.f32 %v365, %v508
    %v510 = vpop.f32.mrb[0].mxu0
    %511 = vdwg.mxu0
    %v512 = vmax.f32 %v450, 0.0
    %v513 = vmax.f32 %v453, 0.0
    %v514 = vmax.f32 %v458, 0.0
    %v515 = vmax.f32 %v461, 0.0
    %v516 = vmax.f32 %v466, 0.0
    %v517 = vmax.f32 %v469, 0.0
    %v518 = vmax.f32 %v474, 0.0
    %v519 = vmax.f32 %v477, 0.0
    %v520 = vmax.f32 %v482, 0.0
    %v521 = vmax.f32 %v485, 0.0
    %v522 = vmax.f32 %v490, 0.0
    %v523 = vmax.f32 %v493, 0.0
    %v524 = vmax.f32 %v498, 0.0
    %v525 = vmax.f32 %v501, 0.0
    %v526 = vmax.f32 %v506, 0.0
    %v527 = vmax.f32 %v509, 0.0
    %v528 = vpack.c.bf16 %v513, %v512
    %v529 = vpack.c.bf16 %v515, %v514
    %v530 = vpack.c.bf16 %v517, %v516
    %v531 = vpack.c.bf16 %v519, %v518
    %v532 = vpack.c.bf16 %v521, %v520
    %v533 = vpack.c.bf16 %v523, %v522
    %v534 = vpack.c.bf16 %v525, %v524
    %v535 = vpack.c.bf16 %v527, %v526
    %v536 = vld [vmem:[#allocation10] sm:$0xf]
    %v537 = vld [vmem:[#allocation10 + $0x4] sm:$0xf]
    %v538 = vld [vmem:[#allocation10 + $0x8] sm:$0xf]
    %v539 = vld [vmem:[#allocation10 + $0xc] sm:$0xf]
    %v540 = vld [vmem:[#allocation10 + $0x10] sm:$0xf]
    %v541 = vld [vmem:[#allocation10 + $0x14] sm:$0xf]
    %v542 = vld [vmem:[#allocation10 + $0x18] sm:$0xf]
    %v543 = vld [vmem:[#allocation10 + $0x1c] sm:$0xf]
    %v544 = vld [vmem:[#allocation10 + $0x20] sm:$0xf]
    %v545 = vld [vmem:[#allocation10 + $0x24] sm:$0xf]
    %v546 = vld [vmem:[#allocation10 + $0x28] sm:$0xf]
    %v547 = vld [vmem:[#allocation10 + $0x2c] sm:$0xf]
    %v548 = vld [vmem:[#allocation10 + $0x30] sm:$0xf]
    %v549 = vld [vmem:[#allocation10 + $0x34] sm:$0xf]
    %v550 = vld [vmem:[#allocation10 + $0x38] sm:$0xf]
    %v551 = vld [vmem:[#allocation10 + $0x3c] sm:$0xf]
    %v568 = vunpack.c.l.b16 %v536
    %v569 = vunpack.c.l.b16 %v537
    %v570 = vunpack.c.l.b16 %v538
    %v571 = vunpack.c.l.b16 %v539
    %v572 = vunpack.c.l.b16 %v540
    %v573 = vunpack.c.l.b16 %v541
    %v574 = vunpack.c.l.b16 %v542
    %v575 = vunpack.c.l.b16 %v543
    %v576 = vunpack.c.l.b16 %v544
    %v577 = vunpack.c.l.b16 %v545
    %v578 = vunpack.c.l.b16 %v546
    %v579 = vunpack.c.l.b16 %v547
    %v580 = vunpack.c.l.b16 %v548
    %v581 = vunpack.c.l.b16 %v549
    %v582 = vunpack.c.l.b16 %v550
    %v583 = vunpack.c.l.b16 %v551
    %v584 = vpack.c.b16 %v569, %v568
    %v585 = vpack.c.b16 %v571, %v570
    %v586 = vpack.c.b16 %v573, %v572
    %v587 = vpack.c.b16 %v575, %v574
    %v588 = vpack.c.b16 %v577, %v576
    %v589 = vpack.c.b16 %v579, %v578
    %v590 = vpack.c.b16 %v581, %v580
    %v591 = vpack.c.b16 %v583, %v582
    %600 = vmatprep.subr.bf16.mxu0 0
    %601 = vmatpush1.bf16.msra.mxu0 %v584
    %602 = vmatprep.subr.bf16.mxu0 0
    %603 = vmatpush1.bf16.msra.mxu0 %v585
    %604 = vmatprep.subr.bf16.mxu0 0
    %605 = vmatpush1.bf16.msra.mxu0 %v586
    %606 = vmatprep.subr.bf16.mxu0 0
    %607 = vmatpush1.bf16.msra.mxu0 %v587
    %608 = vmatprep.subr.bf16.mxu0 0
    %609 = vmatpush1.bf16.msra.mxu0 %v588
    %610 = vmatprep.subr.bf16.mxu0 0
    %611 = vmatpush1.bf16.msra.mxu0 %v589
    %612 = vmatprep.subr.bf16.mxu0 0
    %613 = vmatpush1.bf16.msra.mxu0 %v590
    %614 = vmatprep.subr.bf16.mxu0 0
    %615 = vmatpush1.bf16.msra.mxu0 %v591
    %616 = vmatprep.subr.bf16.mxu0 0
    %617 = vmatpush1.bf16.msra.mxu0 0
    %618 = vmatprep.subr.bf16.mxu0 0
    %619 = vmatpush1.bf16.msra.mxu0 0
    %620 = vmatprep.subr.bf16.mxu0 0
    %621 = vmatpush1.bf16.msra.mxu0 0
    %622 = vmatprep.subr.bf16.mxu0 0
    %623 = vmatpush1.bf16.msra.mxu0 0
    %624 = vmatprep.subr.bf16.mxu0 0
    %625 = vmatpush1.bf16.msra.mxu0 0
    %626 = vmatprep.subr.bf16.mxu0 0
    %627 = vmatpush1.bf16.msra.mxu0 0
    %628 = vmatprep.subr.bf16.mxu0 0
    %629 = vmatpush1.bf16.msra.mxu0 0
    %630 = vmatprep.subr.bf16.mxu0 0
    %631 = vmatpush1.bf16.msra.mxu0 0
    %632 = vmatprep.mubr.bf16.mxu0 0
    %633 = vmatmul.mubr.bf16.gmra.mrb[0].mxu0 %v528
    %v634 = vpop.f32.mrb[0].mxu0
    %v635 = vadd.f32 0.0, %v634
    %v636 = vpop.f32.mrb[0].mxu0
    %v637 = vpop.f32.mrb[0].mxu0
    %v638 = vadd.f32 0.0, %v637
    %v639 = vpop.f32.mrb[0].mxu0
    %640 = vmatprep.mubr.bf16.mxu0 0
    %641 = vmatmul.mubr.bf16.gmra.mrb[0].mxu0 %v529
    %v642 = vpop.f32.mrb[0].mxu0
    %v643 = vadd.f32 0.0, %v642
    %v644 = vpop.f32.mrb[0].mxu0
    %v645 = vpop.f32.mrb[0].mxu0
    %v646 = vadd.f32 0.0, %v645
    %v647 = vpop.f32.mrb[0].mxu0
    %648 = vmatprep.mubr.bf16.mxu0 0
    %649 = vmatmul.mubr.bf16.gmra.mrb[0].mxu0 %v530
    %v650 = vpop.f32.mrb[0].mxu0
    %v651 = vadd.f32 0.0, %v650
    %v652 = vpop.f32.mrb[0].mxu0
    %v653 = vpop.f32.mrb[0].mxu0
    %v654 = vadd.f32 0.0, %v653
    %v655 = vpop.f32.mrb[0].mxu0
    %656 = vmatprep.mubr.bf16.mxu0 0
    %657 = vmatmul.mubr.bf16.gmra.mrb[0].mxu0 %v531
    %v658 = vpop.f32.mrb[0].mxu0
    %v659 = vadd.f32 0.0, %v658
    %v660 = vpop.f32.mrb[0].mxu0
    %v661 = vpop.f32.mrb[0].mxu0
    %v662 = vadd.f32 0.0, %v661
    %v663 = vpop.f32.mrb[0].mxu0
    %664 = vmatprep.mubr.bf16.mxu0 0
    %665 = vmatmul.mubr.bf16.gmra.mrb[0].mxu0 %v532
    %v666 = vpop.f32.mrb[0].mxu0
    %v667 = vadd.f32 0.0, %v666
    %v668 = vpop.f32.mrb[0].mxu0
    %v669 = vpop.f32.mrb[0].mxu0
    %v670 = vadd.f32 0.0, %v669
    %v671 = vpop.f32.mrb[0].mxu0
    %672 = vmatprep.mubr.bf16.mxu0 0
    %673 = vmatmul.mubr.bf16.gmra.mrb[0].mxu0 %v533
    %v674 = vpop.f32.mrb[0].mxu0
    %v675 = vadd.f32 0.0, %v674
    %v676 = vpop.f32.mrb[0].mxu0
    %v677 = vpop.f32.mrb[0].mxu0
    %v678 = vadd.f32 0.0, %v677
    %v679 = vpop.f32.mrb[0].mxu0
    %680 = vmatprep.mubr.bf16.mxu0 0
    %681 = vmatmul.mubr.bf16.gmra.mrb[0].mxu0 %v534
    %v682 = vpop.f32.mrb[0].mxu0
    %v683 = vadd.f32 0.0, %v682
    %v684 = vpop.f32.mrb[0].mxu0
    %v685 = vpop.f32.mrb[0].mxu0
    %v686 = vadd.f32 0.0, %v685
    %v687 = vpop.f32.mrb[0].mxu0
    %688 = vmatprep.mubr.bf16.mxu0 0
    %689 = vmatmul.mubr.bf16.gmra.mrb[0].mxu0 %v535
    %v690 = vpop.f32.mrb[0].mxu0
    %v691 = vadd.f32 0.0, %v690
    %v692 = vpop.f32.mrb[0].mxu0
    %v693 = vpop.f32.mrb[0].mxu0
    %v694 = vadd.f32 0.0, %v693
    %v695 = vpop.f32.mrb[0].mxu0
    %696 = vdwg.mxu0
    %v697 = vpack.c.bf16 %v638, %v635
    %v698 = vpack.c.bf16 %v646, %v643
    %v699 = vpack.c.bf16 %v654, %v651
    %v700 = vpack.c.bf16 %v662, %v659
    %v701 = vpack.c.bf16 %v670, %v667
    %v702 = vpack.c.bf16 %v678, %v675
    %v703 = vpack.c.bf16 %v686, %v683
    %v704 = vpack.c.bf16 %v694, %v691
    %v705 = vld [vmem:[%s5] sm:$0x1]
    %v707 = vlaneseq
    %v708 = vshrl.u32 %v707, 7
    %v709 = vsub.s32 0, %v708
    %v710 = vrot.slane %v705, %v709
    %712 = vmatprep.subr.bf16.mxu0 0
    %713 = vmatpush1.bf16.msra.mxu0 %v697
    %714 = vmatprep.subr.bf16.mxu0 0
    %715 = vmatpush1.bf16.msra.mxu0 %v698
    %716 = vmatprep.subr.bf16.mxu0 0
    %717 = vmatpush1.bf16.msra.mxu0 %v699
    %718 = vmatprep.subr.bf16.mxu0 0
    %719 = vmatpush1.bf16.msra.mxu0 %v700
    %720 = vmatprep.subr.bf16.mxu0 0
    %721 = vmatpush1.bf16.msra.mxu0 %v701
    %722 = vmatprep.subr.bf16.mxu0 0
    %723 = vmatpush1.bf16.msra.mxu0 %v702
    %724 = vmatprep.subr.bf16.mxu0 0
    %725 = vmatpush1.bf16.msra.mxu0 %v703
    %726 = vmatprep.subr.bf16.mxu0 0
    %727 = vmatpush1.bf16.msra.mxu0 %v704
    %728 = vmatprep.subr.bf16.mxu0 0
    %729 = vmatpush1.bf16.msra.mxu0 0
    %730 = vmatprep.subr.bf16.mxu0 0
    %731 = vmatpush1.bf16.msra.mxu0 0
    %732 = vmatprep.subr.bf16.mxu0 0
    %733 = vmatpush1.bf16.msra.mxu0 0
    %734 = vmatprep.subr.bf16.mxu0 0
    %735 = vmatpush1.bf16.msra.mxu0 0
    %736 = vmatprep.subr.bf16.mxu0 0
    %737 = vmatpush1.bf16.msra.mxu0 0
    %738 = vmatprep.subr.bf16.mxu0 0
    %739 = vmatpush1.bf16.msra.mxu0 0
    %740 = vmatprep.subr.bf16.mxu0 0
    %741 = vmatpush1.bf16.msra.mxu0 0
    %742 = vmatprep.subr.bf16.mxu0 0
    %743 = vmatpush1.bf16.msra.mxu0 0
    %744 = vmatprep.mubr.bf16.mxu0 0
    %745 = vmatmul.mubr.bf16.gmra.mrb[0].mxu0 %v399
    %v746 = vpop.f32.mrb[0].mxu0
    %v747 = vadd.f32 %v710, %v746
    %v748 = vpop.f32.mrb[0].mxu0
    %v749 = vpop.f32.mrb[0].mxu0
    %v750 = vadd.f32 %v710, %v749
    %v751 = vpop.f32.mrb[0].mxu0
    %752 = vmatprep.mubr.bf16.mxu0 0
    %753 = vmatmul.mubr.bf16.gmra.mrb[0].mxu0 %v400
    %v754 = vpop.f32.mrb[0].mxu0
    %v755 = vadd.f32 %v710, %v754
    %v756 = vpop.f32.mrb[0].mxu0
    %v757 = vpop.f32.mrb[0].mxu0
    %v758 = vadd.f32 %v710, %v757
    %v759 = vpop.f32.mrb[0].mxu0
    %760 = vmatprep.mubr.bf16.mxu0 0
    %761 = vmatmul.mubr.bf16.gmra.mrb[0].mxu0 %v401
    %v762 = vpop.f32.mrb[0].mxu0
    %v763 = vadd.f32 %v710, %v762
    %v764 = vpop.f32.mrb[0].mxu0
    %v765 = vpop.f32.mrb[0].mxu0
    %v766 = vadd.f32 %v710, %v765
    %v767 = vpop.f32.mrb[0].mxu0
    %768 = vmatprep.mubr.bf16.mxu0 0
    %769 = vmatmul.mubr.bf16.gmra.mrb[0].mxu0 %v402
    %v770 = vpop.f32.mrb[0].mxu0
    %v771 = vadd.f32 %v710, %v770
    %v772 = vpop.f32.mrb[0].mxu0
    %v773 = vpop.f32.mrb[0].mxu0
    %v774 = vadd.f32 %v710, %v773
    %v775 = vpop.f32.mrb[0].mxu0
    %776 = vmatprep.mubr.bf16.mxu0 0
    %777 = vmatmul.mubr.bf16.gmra.mrb[0].mxu0 %v403
    %v778 = vpop.f32.mrb[0].mxu0
    %v779 = vadd.f32 %v710, %v778
    %v780 = vpop.f32.mrb[0].mxu0
    %v781 = vpop.f32.mrb[0].mxu0
    %v782 = vadd.f32 %v710, %v781
    %v783 = vpop.f32.mrb[0].mxu0
    %784 = vmatprep.mubr.bf16.mxu0 0
    %785 = vmatmul.mubr.bf16.gmra.mrb[0].mxu0 %v404
    %v786 = vpop.f32.mrb[0].mxu0
    %v787 = vadd.f32 %v710, %v786
    %v788 = vpop.f32.mrb[0].mxu0
    %v789 = vpop.f32.mrb[0].mxu0
    %v790 = vadd.f32 %v710, %v789
    %v791 = vpop.f32.mrb[0].mxu0
    %792 = vmatprep.mubr.bf16.mxu0 0
    %793 = vmatmul.mubr.bf16.gmra.mrb[0].mxu0 %v405
    %v794 = vpop.f32.mrb[0].mxu0
    %v795 = vadd.f32 %v710, %v794
    %v796 = vpop.f32.mrb[0].mxu0
    %v797 = vpop.f32.mrb[0].mxu0
    %v798 = vadd.f32 %v710, %v797
    %v799 = vpop.f32.mrb[0].mxu0
    %800 = vmatprep.mubr.bf16.mxu0 0
    %801 = vmatmul.mubr.bf16.gmra.mrb[0].mxu0 %v406
    %v802 = vpop.f32.mrb[0].mxu0
    %v803 = vadd.f32 %v710, %v802
    %v804 = vpop.f32.mrb[0].mxu0
    %v805 = vpop.f32.mrb[0].mxu0
    %v806 = vadd.f32 %v710, %v805
    %v807 = vpop.f32.mrb[0].mxu0
    %808 = vdwg.mxu0
    %v809 = vmax.f32 %v747, 0.0
    %v810 = vmax.f32 %v750, 0.0
    %v811 = vmax.f32 %v755, 0.0
    %v812 = vmax.f32 %v758, 0.0
    %v813 = vmax.f32 %v763, 0.0
    %v814 = vmax.f32 %v766, 0.0
    %v815 = vmax.f32 %v771, 0.0
    %v816 = vmax.f32 %v774, 0.0
    %v817 = vmax.f32 %v779, 0.0
    %v818 = vmax.f32 %v782, 0.0
    %v819 = vmax.f32 %v787, 0.0
    %v820 = vmax.f32 %v790, 0.0
    %v821 = vmax.f32 %v795, 0.0
    %v822 = vmax.f32 %v798, 0.0
    %v823 = vmax.f32 %v803, 0.0
    %v824 = vmax.f32 %v806, 0.0
    %v825 = vpack.c.bf16 %v810, %v809
    %v826 = vpack.c.bf16 %v812, %v811
    %v827 = vpack.c.bf16 %v814, %v813
    %v828 = vpack.c.bf16 %v816, %v815
    %v829 = vpack.c.bf16 %v818, %v817
    %v830 = vpack.c.bf16 %v820, %v819
    %v831 = vpack.c.bf16 %v822, %v821
    %v832 = vpack.c.bf16 %v824, %v823
    %v833 = vld [vmem:[#allocation11] sm:$0xf]
    %v834 = vld [vmem:[#allocation11 + $0x4] sm:$0xf]
    %v835 = vld [vmem:[#allocation11 + $0x8] sm:$0xf]
    %v836 = vld [vmem:[#allocation11 + $0xc] sm:$0xf]
    %v837 = vld [vmem:[#allocation11 + $0x10] sm:$0xf]
    %v838 = vld [vmem:[#allocation11 + $0x14] sm:$0xf]
    %v839 = vld [vmem:[#allocation11 + $0x18] sm:$0xf]
    %v840 = vld [vmem:[#allocation11 + $0x1c] sm:$0xf]
    %v841 = vld [vmem:[#allocation11 + $0x20] sm:$0xf]
    %v842 = vld [vmem:[#allocation11 + $0x24] sm:$0xf]
    %v843 = vld [vmem:[#allocation11 + $0x28] sm:$0xf]
    %v844 = vld [vmem:[#allocation11 + $0x2c] sm:$0xf]
    %v845 = vld [vmem:[#allocation11 + $0x30] sm:$0xf]
    %v846 = vld [vmem:[#allocation11 + $0x34] sm:$0xf]
    %v847 = vld [vmem:[#allocation11 + $0x38] sm:$0xf]
    %v848 = vld [vmem:[#allocation11 + $0x3c] sm:$0xf]
    %v865 = vunpack.c.l.b16 %v833
    %v866 = vunpack.c.l.b16 %v834
    %v867 = vunpack.c.l.b16 %v835
    %v868 = vunpack.c.l.b16 %v836
    %v869 = vunpack.c.l.b16 %v837
    %v870 = vunpack.c.l.b16 %v838
    %v871 = vunpack.c.l.b16 %v839
    %v872 = vunpack.c.l.b16 %v840
    %v873 = vunpack.c.l.b16 %v841
    %v874 = vunpack.c.l.b16 %v842
    %v875 = vunpack.c.l.b16 %v843
    %v876 = vunpack.c.l.b16 %v844
    %v877 = vunpack.c.l.b16 %v845
    %v878 = vunpack.c.l.b16 %v846
    %v879 = vunpack.c.l.b16 %v847
    %v880 = vunpack.c.l.b16 %v848
    %v881 = vpack.c.b16 %v866, %v865
    %v882 = vpack.c.b16 %v868, %v867
    %v883 = vpack.c.b16 %v870, %v869
    %v884 = vpack.c.b16 %v872, %v871
    %v885 = vpack.c.b16 %v874, %v873
    %v886 = vpack.c.b16 %v876, %v875
    %v887 = vpack.c.b16 %v878, %v877
    %v888 = vpack.c.b16 %v880, %v879
    %897 = vmatprep.subr.bf16.mxu0 0
    %898 = vmatpush1.bf16.msra.mxu0 %v881
    %899 = vmatprep.subr.bf16.mxu0 0
    %900 = vmatpush1.bf16.msra.mxu0 %v882
    %901 = vmatprep.subr.bf16.mxu0 0
    %902 = vmatpush1.bf16.msra.mxu0 %v883
    %903 = vmatprep.subr.bf16.mxu0 0
    %904 = vmatpush1.bf16.msra.mxu0 %v884
    %905 = vmatprep.subr.bf16.mxu0 0
    %906 = vmatpush1.bf16.msra.mxu0 %v885
    %907 = vmatprep.subr.bf16.mxu0 0
    %908 = vmatpush1.bf16.msra.mxu0 %v886
    %909 = vmatprep.subr.bf16.mxu0 0
    %910 = vmatpush1.bf16.msra.mxu0 %v887
    %911 = vmatprep.subr.bf16.mxu0 0
    %912 = vmatpush1.bf16.msra.mxu0 %v888
    %913 = vmatprep.subr.bf16.mxu0 0
    %914 = vmatpush1.bf16.msra.mxu0 0
    %915 = vmatprep.subr.bf16.mxu0 0
    %916 = vmatpush1.bf16.msra.mxu0 0
    %917 = vmatprep.subr.bf16.mxu0 0
    %918 = vmatpush1.bf16.msra.mxu0 0
    %919 = vmatprep.subr.bf16.mxu0 0
    %920 = vmatpush1.bf16.msra.mxu0 0
    %921 = vmatprep.subr.bf16.mxu0 0
    %922 = vmatpush1.bf16.msra.mxu0 0
    %923 = vmatprep.subr.bf16.mxu0 0
    %924 = vmatpush1.bf16.msra.mxu0 0
    %925 = vmatprep.subr.bf16.mxu0 0
    %926 = vmatpush1.bf16.msra.mxu0 0
    %927 = vmatprep.subr.bf16.mxu0 0
    %928 = vmatpush1.bf16.msra.mxu0 0
    %929 = vmatprep.mubr.bf16.mxu0 0
    %930 = vmatmul.mubr.bf16.gmra.mrb[0].mxu0 %v825
    %v931 = vpop.f32.mrb[0].mxu0
    %v932 = vadd.f32 0.0, %v931
    %v933 = vpop.f32.mrb[0].mxu0
    %v934 = vpop.f32.mrb[0].mxu0
    %v935 = vadd.f32 0.0, %v934
    %v936 = vpop.f32.mrb[0].mxu0
    %937 = vmatprep.mubr.bf16.mxu0 0
    %938 = vmatmul.mubr.bf16.gmra.mrb[0].mxu0 %v826
    %v939 = vpop.f32.mrb[0].mxu0
    %v940 = vadd.f32 0.0, %v939
    %v941 = vpop.f32.mrb[0].mxu0
    %v942 = vpop.f32.mrb[0].mxu0
    %v943 = vadd.f32 0.0, %v942
    %v944 = vpop.f32.mrb[0].mxu0
    %945 = vmatprep.mubr.bf16.mxu0 0
    %946 = vmatmul.mubr.bf16.gmra.mrb[0].mxu0 %v827
    %v947 = vpop.f32.mrb[0].mxu0
    %v948 = vadd.f32 0.0, %v947
    %v949 = vpop.f32.mrb[0].mxu0
    %v950 = vpop.f32.mrb[0].mxu0
    %v951 = vadd.f32 0.0, %v950
    %v952 = vpop.f32.mrb[0].mxu0
    %953 = vmatprep.mubr.bf16.mxu0 0
    %954 = vmatmul.mubr.bf16.gmra.mrb[0].mxu0 %v828
    %v955 = vpop.f32.mrb[0].mxu0
    %v956 = vadd.f32 0.0, %v955
    %v957 = vpop.f32.mrb[0].mxu0
    %v958 = vpop.f32.mrb[0].mxu0
    %v959 = vadd.f32 0.0, %v958
    %v960 = vpop.f32.mrb[0].mxu0
    %961 = vmatprep.mubr.bf16.mxu0 0
    %962 = vmatmul.mubr.bf16.gmra.mrb[0].mxu0 %v829
    %v963 = vpop.f32.mrb[0].mxu0
    %v964 = vadd.f32 0.0, %v963
    %v965 = vpop.f32.mrb[0].mxu0
    %v966 = vpop.f32.mrb[0].mxu0
    %v967 = vadd.f32 0.0, %v966
    %v968 = vpop.f32.mrb[0].mxu0
    %969 = vmatprep.mubr.bf16.mxu0 0
    %970 = vmatmul.mubr.bf16.gmra.mrb[0].mxu0 %v830
    %v971 = vpop.f32.mrb[0].mxu0
    %v972 = vadd.f32 0.0, %v971
    %v973 = vpop.f32.mrb[0].mxu0
    %v974 = vpop.f32.mrb[0].mxu0
    %v975 = vadd.f32 0.0, %v974
    %v976 = vpop.f32.mrb[0].mxu0
    %977 = vmatprep.mubr.bf16.mxu0 0
    %978 = vmatmul.mubr.bf16.gmra.mrb[0].mxu0 %v831
    %v979 = vpop.f32.mrb[0].mxu0
    %v980 = vadd.f32 0.0, %v979
    %v981 = vpop.f32.mrb[0].mxu0
    %v982 = vpop.f32.mrb[0].mxu0
    %v983 = vadd.f32 0.0, %v982
    %v984 = vpop.f32.mrb[0].mxu0
    %985 = vmatprep.mubr.bf16.mxu0 0
    %986 = vmatmul.mubr.bf16.gmra.mrb[0].mxu0 %v832
    %v987 = vpop.f32.mrb[0].mxu0
    %v988 = vadd.f32 0.0, %v987
    %v989 = vpop.f32.mrb[0].mxu0
    %v990 = vpop.f32.mrb[0].mxu0
    %v991 = vadd.f32 0.0, %v990
    %v992 = vpop.f32.mrb[0].mxu0
    %993 = vdwg.mxu0
    %v994 = vpack.c.bf16 %v935, %v932
    %v995 = vpack.c.bf16 %v943, %v940
    %v996 = vpack.c.bf16 %v951, %v948
    %v997 = vpack.c.bf16 %v959, %v956
    %v998 = vpack.c.bf16 %v967, %v964
    %v999 = vpack.c.bf16 %v975, %v972
    %v1000 = vpack.c.bf16 %v983, %v980
    %v1001 = vpack.c.bf16 %v991, %v988
    %v1002 = vld [vmem:[%s7] sm:$0x1]
    %v1004 = vlaneseq
    %v1005 = vshrl.u32 %v1004, 7
    %v1006 = vsub.s32 0, %v1005
    %v1007 = vrot.slane %v1002, %v1006
    %1009 = vmatprep.subr.bf16.mxu0 0
    %1010 = vmatpush1.bf16.msra.mxu0 %v994
    %1011 = vmatprep.subr.bf16.mxu0 0
    %1012 = vmatpush1.bf16.msra.mxu0 %v995
    %1013 = vmatprep.subr.bf16.mxu0 0
    %1014 = vmatpush1.bf16.msra.mxu0 %v996
    %1015 = vmatprep.subr.bf16.mxu0 0
    %1016 = vmatpush1.bf16.msra.mxu0 %v997
    %1017 = vmatprep.subr.bf16.mxu0 0
    %1018 = vmatpush1.bf16.msra.mxu0 %v998
    %1019 = vmatprep.subr.bf16.mxu0 0
    %1020 = vmatpush1.bf16.msra.mxu0 %v999
    %1021 = vmatprep.subr.bf16.mxu0 0
    %1022 = vmatpush1.bf16.msra.mxu0 %v1000
    %1023 = vmatprep.subr.bf16.mxu0 0
    %1024 = vmatpush1.bf16.msra.mxu0 %v1001
    %1025 = vmatprep.subr.bf16.mxu0 0
    %1026 = vmatpush1.bf16.msra.mxu0 0
    %1027 = vmatprep.subr.bf16.mxu0 0
    %1028 = vmatpush1.bf16.msra.mxu0 0
    %1029 = vmatprep.subr.bf16.mxu0 0
    %1030 = vmatpush1.bf16.msra.mxu0 0
    %1031 = vmatprep.subr.bf16.mxu0 0
    %1032 = vmatpush1.bf16.msra.mxu0 0
    %1033 = vmatprep.subr.bf16.mxu0 0
    %1034 = vmatpush1.bf16.msra.mxu0 0
    %1035 = vmatprep.subr.bf16.mxu0 0
    %1036 = vmatpush1.bf16.msra.mxu0 0
    %1037 = vmatprep.subr.bf16.mxu0 0
    %1038 = vmatpush1.bf16.msra.mxu0 0
    %1039 = vmatprep.subr.bf16.mxu0 0
    %1040 = vmatpush1.bf16.msra.mxu0 0
    %1041 = vmatprep.mubr.bf16.mxu0 0
    %1042 = vmatmul.mubr.bf16.gmra.mrb[0].mxu0 %v399
    %v1043 = vpop.f32.mrb[0].mxu0
    %v1044 = vadd.f32 %v1007, %v1043
    %v1045 = vpop.f32.mrb[0].mxu0
    %v1046 = vpop.f32.mrb[0].mxu0
    %v1047 = vadd.f32 %v1007, %v1046
    %v1048 = vpop.f32.mrb[0].mxu0
    %1049 = vmatprep.mubr.bf16.mxu0 0
    %1050 = vmatmul.mubr.bf16.gmra.mrb[0].mxu0 %v400
    %v1051 = vpop.f32.mrb[0].mxu0
    %v1052 = vadd.f32 %v1007, %v1051
    %v1053 = vpop.f32.mrb[0].mxu0
    %v1054 = vpop.f32.mrb[0].mxu0
    %v1055 = vadd.f32 %v1007, %v1054
    %v1056 = vpop.f32.mrb[0].mxu0
    %1057 = vmatprep.mubr.bf16.mxu0 0
    %1058 = vmatmul.mubr.bf16.gmra.mrb[0].mxu0 %v401
    %v1059 = vpop.f32.mrb[0].mxu0
    %v1060 = vadd.f32 %v1007, %v1059
    %v1061 = vpop.f32.mrb[0].mxu0
    %v1062 = vpop.f32.mrb[0].mxu0
    %v1063 = vadd.f32 %v1007, %v1062
    %v1064 = vpop.f32.mrb[0].mxu0
    %1065 = vmatprep.mubr.bf16.mxu0 0
    %1066 = vmatmul.mubr.bf16.gmra.mrb[0].mxu0 %v402
    %v1067 = vpop.f32.mrb[0].mxu0
    %v1068 = vadd.f32 %v1007, %v1067
    %v1069 = vpop.f32.mrb[0].mxu0
    %v1070 = vpop.f32.mrb[0].mxu0
    %v1071 = vadd.f32 %v1007, %v1070
    %v1072 = vpop.f32.mrb[0].mxu0
    %1073 = vmatprep.mubr.bf16.mxu0 0
    %1074 = vmatmul.mubr.bf16.gmra.mrb[0].mxu0 %v403
    %v1075 = vpop.f32.mrb[0].mxu0
    %v1076 = vadd.f32 %v1007, %v1075
    %v1077 = vpop.f32.mrb[0].mxu0
    %v1078 = vpop.f32.mrb[0].mxu0
    %v1079 = vadd.f32 %v1007, %v1078
    %v1080 = vpop.f32.mrb[0].mxu0
    %1081 = vmatprep.mubr.bf16.mxu0 0
    %1082 = vmatmul.mubr.bf16.gmra.mrb[0].mxu0 %v404
    %v1083 = vpop.f32.mrb[0].mxu0
    %v1084 = vadd.f32 %v1007, %v1083
    %v1085 = vpop.f32.mrb[0].mxu0
    %v1086 = vpop.f32.mrb[0].mxu0
    %v1087 = vadd.f32 %v1007, %v1086
    %v1088 = vpop.f32.mrb[0].mxu0
    %1089 = vmatprep.mubr.bf16.mxu0 0
    %1090 = vmatmul.mubr.bf16.gmra.mrb[0].mxu0 %v405
    %v1091 = vpop.f32.mrb[0].mxu0
    %v1092 = vadd.f32 %v1007, %v1091
    %v1093 = vpop.f32.mrb[0].mxu0
    %v1094 = vpop.f32.mrb[0].mxu0
    %v1095 = vadd.f32 %v1007, %v1094
    %v1096 = vpop.f32.mrb[0].mxu0
    %1097 = vmatprep.mubr.bf16.mxu0 0
    %1098 = vmatmul.mubr.bf16.gmra.mrb[0].mxu0 %v406
    %v1099 = vpop.f32.mrb[0].mxu0
    %v1100 = vadd.f32 %v1007, %v1099
    %v1101 = vpop.f32.mrb[0].mxu0
    %v1102 = vpop.f32.mrb[0].mxu0
    %v1103 = vadd.f32 %v1007, %v1102
    %v1104 = vpop.f32.mrb[0].mxu0
    %1105 = vdwg.mxu0
    %1106 = vst [vmem:[#allocation13] sm:$0xff] %v1044
    %1107 = vst [vmem:[#allocation13 + $0x8] sm:$0xff] %v1047
    %1108 = vst [vmem:[#allocation13 + $0x10] sm:$0xff] %v1052
    %1109 = vst [vmem:[#allocation13 + $0x18] sm:$0xff] %v1055
    %1110 = vst [vmem:[#allocation13 + $0x20] sm:$0xff] %v1060
    %1111 = vst [vmem:[#allocation13 + $0x28] sm:$0xff] %v1063
    %1112 = vst [vmem:[#allocation13 + $0x30] sm:$0xff] %v1068
    %1113 = vst [vmem:[#allocation13 + $0x38] sm:$0xff] %v1071
    %1114 = vst [vmem:[#allocation13 + $0x40] sm:$0xff] %v1076
    %1115 = vst [vmem:[#allocation13 + $0x48] sm:$0xff] %v1079
    %1116 = vst [vmem:[#allocation13 + $0x50] sm:$0xff] %v1084
    %1117 = vst [vmem:[#allocation13 + $0x58] sm:$0xff] %v1087
    %1118 = vst [vmem:[#allocation13 + $0x60] sm:$0xff] %v1092
    %1119 = vst [vmem:[#allocation13 + $0x68] sm:$0xff] %v1095
    %1120 = vst [vmem:[#allocation13 + $0x70] sm:$0xff] %v1100
    %1121 = vst [vmem:[#allocation13 + $0x78] sm:$0xff] %v1103
    // Predicated region
    $region58: #{gcn_forward_fused.1} parent=1 // pred_check
      _
    $region59: #{gcn_forward_fused.1} parent=1 // pred_check_branch
      %1123 = sbr.rel (0) target = $region61
    $region60: #{gcn_forward_fused.1} parent=1 // pred_region
      %s1125 = ssub.s32 2048, 2048
      %1126 = vsyncadd [#allocation4], %s1125
      %s1127 = sshll.u32 [#allocation13], 4
      %s1128 = int_to_ptr.vmem [resolvable:$true] %s1127
      %1133 = dma.vmem_to_hbm [thread:$0]  %s1128, 2048, %s8, [#allocation4], 128, 128, 8
    $region61: #{gcn_forward_fused.1} parent=1 // pred_fallthru
      _
    // Predicated region
    $region62: #{gcn_forward_fused.1} parent=1 // pred_check
      _
    $region63: #{gcn_forward_fused.1} parent=1 // pred_check_branch
      %1135 = sbr.rel (0) target = $region65
    $region64: #{gcn_forward_fused.1} parent=1 // pred_region
      %1136 = dma.done [#allocation4], 2048
    $region65: #{gcn_forward_fused.1} parent=1 // pred_fallthru
      _
    %1137 = vsyncpa [#allocation3], 1
    %1138 = vsyncpa [#allocation6], 1
    %1139 = vsyncpa [#allocation9], 1
    %1140 = vsyncpa [#allocation12], 1
    %1141 = vsyncpa [#allocation4], 1

</llo_original>
